<compile_context>
chip_gen: v5e
topology: v5e:2x2
jax: 0.10.0
libtpu: 0.0.40
codegen_flags: <defaults>
</compile_context>

<pallas_src>
import jax
import jax.numpy as jnp
from jax.experimental import pallas as pl
from jax.experimental.pallas import tpu as pltpu


def _round_up(n, m):
    return ((n + m - 1) // m) * m


def expert_kernel(x_ref, w1_ref, b1_ref, w2_ref, b2_ref, wf_ref, bf_ref, o_ref):
    # x: (TM, 768) f32; w*: bf16; b*: f32; o: (TM, 8) f32 (lane-padded to 8).
    x = x_ref[...].astype(jnp.bfloat16)   # cast in-kernel, right before the MXU

    # ---- fc1 (bf16 MXU inputs, f32 accumulate) + InstanceNorm + ReLU -------
    h1 = jnp.dot(x, w1_ref[...], preferred_element_type=jnp.float32) + b1_ref[...]
    m1 = jnp.mean(h1, axis=-1, keepdims=True)
    d1 = h1 - m1
    v1 = jnp.mean(d1 * d1, axis=-1, keepdims=True)
    r1 = jnp.maximum(d1 * jax.lax.rsqrt(v1 + 1e-5), 0.0)
    # Dropout(p=0.5): eval mode -> identity

    # ---- fc2 + InstanceNorm + ReLU ------------------------------------------
    h2 = (jnp.dot(r1.astype(jnp.bfloat16), w2_ref[...],
                  preferred_element_type=jnp.float32) + b2_ref[...])
    m2 = jnp.mean(h2, axis=-1, keepdims=True)
    d2 = h2 - m2
    v2 = jnp.mean(d2 * d2, axis=-1, keepdims=True)
    r2 = jnp.maximum(d2 * jax.lax.rsqrt(v2 + 1e-5), 0.0)
    # Dropout(p=0.5): eval mode -> identity

    # ---- fused fc3 @ mapper (output zero-padded to 8 lanes) ------------------
    out = (jnp.dot(r2.astype(jnp.bfloat16), wf_ref[...],
                   preferred_element_type=jnp.float32) + bf_ref[...])
    o_ref[...] = out.astype(o_ref.dtype)


def prepare_expert_params(w1, b1, w2, b2, w3, b3, wm, bm):
    """One-time weight prep: fuse fc3->mapper, pad to 8 lanes, cast matmul weights to bf16."""
    proj_dim = wm.shape[1]
    h2_dim = w3.shape[0]
    # Exact linear composition: out = r2 @ (W3 Wm) + (b3 Wm + bm)
    wf = w3 @ wm                            # (h2, proj)
    bf = b3 @ wm + bm                       # (1, proj)
    n_pad = _round_up(proj_dim, 8)          # small, lane-masked store is fine
    wf_p = jnp.zeros((h2_dim, n_pad), jnp.float32).at[:, :proj_dim].set(wf)
    bf_p = jnp.zeros((1, n_pad), jnp.float32).at[:, :proj_dim].set(bf)
    return {
        "w1": w1.astype(jnp.bfloat16), "b1": b1,
        "w2": w2.astype(jnp.bfloat16), "b2": b2,
        "wf": wf_p.astype(jnp.bfloat16), "bf": bf_p,
        "proj_dim": int(proj_dim),
    }


def expert_forward(x, params, *, tile_rows=1024):
    """x: (rows, input_size) f32. params from prepare_expert_params. Returns (rows, proj) f32."""
    rows, in_dim = x.shape
    w1b, b1 = params["w1"], params["b1"]
    w2b, b2 = params["w2"], params["b2"]
    wfb, bfp = params["wf"], params["bf"]
    proj_dim = params["proj_dim"]
    h1_dim = w1b.shape[1]                   # 128
    h2_dim = w2b.shape[1]                   # 64
    n_pad = wfb.shape[1]                    # 8

    # Row tile: at most tile_rows, but ensure >=2 grid steps so the "parallel"
    # row axis can shard across both v7x TensorCores (harmless on v5e/v6e).
    TM = min(tile_rows, _round_up(max(pl.cdiv(rows, 2), 8), 8))
    grid = (pl.cdiv(rows, TM),)             # ragged last tile is masked by Pallas

    out = pl.pallas_call(
        expert_kernel,
        out_shape=jax.ShapeDtypeStruct((rows, n_pad), jnp.float32),
        grid=grid,
        in_specs=[
            pl.BlockSpec((TM, in_dim), lambda i: (i, 0)),      # x tile (moves)
            pl.BlockSpec((in_dim, h1_dim), lambda i: (0, 0)),  # w1 (VMEM-resident)
            pl.BlockSpec((1, h1_dim), lambda i: (0, 0)),       # b1
            pl.BlockSpec((h1_dim, h2_dim), lambda i: (0, 0)),  # w2
            pl.BlockSpec((1, h2_dim), lambda i: (0, 0)),       # b2
            pl.BlockSpec((h2_dim, n_pad), lambda i: (0, 0)),   # fused fc3@mapper weight
            pl.BlockSpec((1, n_pad), lambda i: (0, 0)),        # fused bias
        ],
        out_specs=pl.BlockSpec((TM, n_pad), lambda i: (i, 0)),
        compiler_params=pltpu.CompilerParams(
            dimension_semantics=("parallel",)),
        cost_estimate=pl.CostEstimate(
            flops=2 * rows * (in_dim * h1_dim + h1_dim * h2_dim + h2_dim * n_pad),
            transcendentals=2 * rows,
            bytes_accessed=(x.size * 4 + rows * n_pad * 4
                            + w1b.size * 2 + w2b.size * 2 + wfb.size * 2
                            + b1.size * 4 + b2.size * 4 + bfp.size * 4),
        ),
    )(x, w1b, b1, w2b, b2, wfb, bfp)

    return out[:, :proj_dim]


# ----------------------------- reference & init ------------------------------

def xavier_uniform(key, fan_in, fan_out):
    bound = (6.0 / (fan_in + fan_out)) ** 0.5
    return jax.random.uniform(key, (fan_in, fan_out), jnp.float32, -bound, bound)


def default_linear_weight(key, fan_in, fan_out):
    # PyTorch default Linear weight init (kaiming_uniform(a=sqrt(5))) bound.
    bound = 1.0 / (fan_in ** 0.5)
    return jax.random.uniform(key, (fan_in, fan_out), jnp.float32, -bound, bound)


def linear_bias(key, fan_in, n):
    bound = 1.0 / (fan_in ** 0.5)
    return jax.random.uniform(key, (1, n), jnp.float32, -bound, bound)


def reference(x, w1, b1, w2, b2, w3, b3, wm, bm):
    """Pure-JAX reference matching the kernel's math (bf16 matmuls, f32 norm)."""
    def dot(a, b):
        return jnp.dot(a.astype(jnp.bfloat16), b.astype(jnp.bfloat16),
                       preferred_element_type=jnp.float32)

    def inorm_relu(h):
        m = jnp.mean(h, axis=-1, keepdims=True)
        d = h - m
        v = jnp.mean(d * d, axis=-1, keepdims=True)
        return jnp.maximum(d * jax.lax.rsqrt(v + 1e-5), 0.0)

    r1 = inorm_relu(dot(x, w1) + b1)        # fc1 + InstanceNorm + ReLU (+dropout=id)
    r2 = inorm_relu(dot(r1, w2) + b2)       # fc2 + InstanceNorm + ReLU (+dropout=id)
    wf = w3 @ wm                            # fused fc3 -> mapper
    bf = b3 @ wm + bm
    return dot(r2, wf) + bf


if __name__ == "__main__":
    input_size, hidden1, hidden2 = 768, 128, 64
    output_size, projected_output_size = 2, 2
    batch, seq = 2, 8                       # x: (batch, seq, input_size)

    key = jax.random.PRNGKey(0)
    ks = jax.random.split(key, 9)

    x = jax.random.normal(ks[0], (batch, seq, input_size), jnp.float32)
    # Weights stored as (in, out) so the kernel does x @ W (PyTorch does x @ W.T).
    w1 = xavier_uniform(ks[1], input_size, hidden1)
    b1 = linear_bias(ks[2], input_size, hidden1)
    w2 = xavier_uniform(ks[3], hidden1, hidden2)
    b2 = linear_bias(ks[4], hidden1, hidden2)
    w3 = xavier_uniform(ks[5], hidden2, output_size)
    b3 = linear_bias(ks[6], hidden2, output_size)
    wm = default_linear_weight(ks[7], output_size, projected_output_size)
    bm = linear_bias(ks[8], output_size, projected_output_size)

    # One-time weight preparation (fusion / padding / bf16 cast), reused per call.
    params = prepare_expert_params(w1, b1, w2, b2, w3, b3, wm, bm)
    params = jax.tree_util.tree_map(
        lambda a: jax.block_until_ready(a) if isinstance(a, jax.Array) else a, params)

    x2d = x.reshape(batch * seq, input_size)
    out = expert_forward(x2d, params)
    out = jax.block_until_ready(out).reshape(batch, seq, projected_output_size)

    ref = reference(x2d, w1, b1, w2, b2, w3, b3, wm, bm)
    ref = ref.reshape(batch, seq, projected_output_size)

    assert out.shape == (batch, seq, projected_output_size)
    assert jnp.allclose(out, ref, atol=2e-3, rtol=2e-3), "mismatch vs reference"

    print("KERNEL_OK")
</pallas_src>

<mosaic_0001>
module attributes {stable_mosaic.version = 11 : i64} {
  func.func @expert_kernel(%arg0: i32, %arg1: memref<8x768xf32, #tpu.memory_space<vmem>>, %arg2: memref<768x128xbf16, #tpu.memory_space<vmem>>, %arg3: memref<1x128xf32, #tpu.memory_space<vmem>>, %arg4: memref<128x64xbf16, #tpu.memory_space<vmem>>, %arg5: memref<1x64xf32, #tpu.memory_space<vmem>>, %arg6: memref<64x8xbf16, #tpu.memory_space<vmem>>, %arg7: memref<1x8xf32, #tpu.memory_space<vmem>>, %arg8: memref<8x8xf32, #tpu.memory_space<vmem>>) attributes {dimension_semantics = [#tpu.dimension_semantics<parallel>], iteration_bounds = array<i64: 2>, scalar_prefetch = 0 : i64, scratch_operands = 0 : i64, tpu.core_type = #tpu.core_type<tc>, window_params = [{transform_indices = @transform_0, window_bounds = array<i64: 8, 768>}, {pipeline_mode = #tpu.pipeline_mode<synchronous>, transform_indices = @transform_1, window_bounds = array<i64: 768, 128>}, {pipeline_mode = #tpu.pipeline_mode<synchronous>, transform_indices = @transform_2, window_bounds = array<i64: 1, 128>}, {pipeline_mode = #tpu.pipeline_mode<synchronous>, transform_indices = @transform_3, window_bounds = array<i64: 128, 64>}, {pipeline_mode = #tpu.pipeline_mode<synchronous>, transform_indices = @transform_4, window_bounds = array<i64: 1, 64>}, {pipeline_mode = #tpu.pipeline_mode<synchronous>, transform_indices = @transform_5, window_bounds = array<i64: 64, 8>}, {pipeline_mode = #tpu.pipeline_mode<synchronous>, transform_indices = @transform_6, window_bounds = array<i64: 1, 8>}, {transform_indices = @transform_7, window_bounds = array<i64: 8, 8>}]} {
    %c0 = arith.constant 0 : index
    %c0_0 = arith.constant 0 : index
    %0 = vector.load %arg1[%c0, %c0_0] : memref<8x768xf32, #tpu.memory_space<vmem>>, vector<8x768xf32>
    %1 = arith.truncf %0 : vector<8x768xf32> to vector<8x768xbf16>
    %c0_1 = arith.constant 0 : index
    %c0_2 = arith.constant 0 : index
    %2 = vector.load %arg2[%c0_1, %c0_2] : memref<768x128xbf16, #tpu.memory_space<vmem>>, vector<768x128xbf16>
    %cst = arith.constant dense<0.000000e+00> : vector<8x128xf32>
    %3 = tpu.matmul %1, %2, %cst {dimension_numbers = #tpu.dot_dimension_numbers<[1], [0], [0], [1], [0, 0, 1, 1], [], []>} : vector<8x768xbf16>, vector<768x128xbf16>, vector<8x128xf32> -> vector<8x128xf32>
    %c0_3 = arith.constant 0 : index
    %c0_4 = arith.constant 0 : index
    %4 = vector.load %arg3[%c0_3, %c0_4] : memref<1x128xf32, #tpu.memory_space<vmem>>, vector<1x128xf32>
    %5 = vector.broadcast %4 : vector<1x128xf32> to vector<8x128xf32>
    %6 = arith.addf %3, %5 : vector<8x128xf32>
    %cst_5 = arith.constant dense<0.000000e+00> : vector<8xf32>
    %7 = vector.multi_reduction <add>, %6, %cst_5 [1] : vector<8x128xf32> to vector<8xf32>
    %8 = vector.shape_cast %7 : vector<8xf32> to vector<8x1xf32>
    %cst_6 = arith.constant 1.280000e+02 : f32
    %9 = vector.broadcast %cst_6 : f32 to vector<8x1xf32>
    %10 = arith.divf %8, %9 : vector<8x1xf32>
    %11 = vector.broadcast %10 : vector<8x1xf32> to vector<8x128xf32>
    %12 = arith.subf %6, %11 : vector<8x128xf32>
    %13 = arith.mulf %12, %12 : vector<8x128xf32>
    %cst_7 = arith.constant dense<0.000000e+00> : vector<8xf32>
    %14 = vector.multi_reduction <add>, %13, %cst_7 [1] : vector<8x128xf32> to vector<8xf32>
    %15 = vector.shape_cast %14 : vector<8xf32> to vector<8x1xf32>
    %cst_8 = arith.constant 1.280000e+02 : f32
    %16 = vector.broadcast %cst_8 : f32 to vector<8x1xf32>
    %17 = arith.divf %15, %16 : vector<8x1xf32>
    %cst_9 = arith.constant 9.99999974E-6 : f32
    %18 = vector.broadcast %cst_9 : f32 to vector<8x1xf32>
    %19 = arith.addf %17, %18 : vector<8x1xf32>
    %20 = math.rsqrt %19 : vector<8x1xf32>
    %21 = vector.broadcast %20 : vector<8x1xf32> to vector<8x128xf32>
    %22 = arith.mulf %12, %21 : vector<8x128xf32>
    %cst_10 = arith.constant 0.000000e+00 : f32
    %23 = vector.broadcast %cst_10 : f32 to vector<8x128xf32>
    %24 = arith.maximumf %22, %23 : vector<8x128xf32>
    %25 = arith.truncf %24 : vector<8x128xf32> to vector<8x128xbf16>
    %c0_11 = arith.constant 0 : index
    %c0_12 = arith.constant 0 : index
    %26 = vector.load %arg4[%c0_11, %c0_12] : memref<128x64xbf16, #tpu.memory_space<vmem>>, vector<128x64xbf16>
    %cst_13 = arith.constant dense<0.000000e+00> : vector<8x64xf32>
    %27 = tpu.matmul %25, %26, %cst_13 {dimension_numbers = #tpu.dot_dimension_numbers<[1], [0], [0], [1], [0, 0, 1, 1], [], []>} : vector<8x128xbf16>, vector<128x64xbf16>, vector<8x64xf32> -> vector<8x64xf32>
    %c0_14 = arith.constant 0 : index
    %c0_15 = arith.constant 0 : index
    %28 = vector.load %arg5[%c0_14, %c0_15] : memref<1x64xf32, #tpu.memory_space<vmem>>, vector<1x64xf32>
    %29 = vector.broadcast %28 : vector<1x64xf32> to vector<8x64xf32>
    %30 = arith.addf %27, %29 : vector<8x64xf32>
    %cst_16 = arith.constant dense<0.000000e+00> : vector<8xf32>
    %31 = vector.multi_reduction <add>, %30, %cst_16 [1] : vector<8x64xf32> to vector<8xf32>
    %32 = vector.shape_cast %31 : vector<8xf32> to vector<8x1xf32>
    %cst_17 = arith.constant 6.400000e+01 : f32
    %33 = vector.broadcast %cst_17 : f32 to vector<8x1xf32>
    %34 = arith.divf %32, %33 : vector<8x1xf32>
    %35 = vector.broadcast %34 : vector<8x1xf32> to vector<8x64xf32>
    %36 = arith.subf %30, %35 : vector<8x64xf32>
    %37 = arith.mulf %36, %36 : vector<8x64xf32>
    %cst_18 = arith.constant dense<0.000000e+00> : vector<8xf32>
    %38 = vector.multi_reduction <add>, %37, %cst_18 [1] : vector<8x64xf32> to vector<8xf32>
    %39 = vector.shape_cast %38 : vector<8xf32> to vector<8x1xf32>
    %cst_19 = arith.constant 6.400000e+01 : f32
    %40 = vector.broadcast %cst_19 : f32 to vector<8x1xf32>
    %41 = arith.divf %39, %40 : vector<8x1xf32>
    %cst_20 = arith.constant 9.99999974E-6 : f32
    %42 = vector.broadcast %cst_20 : f32 to vector<8x1xf32>
    %43 = arith.addf %41, %42 : vector<8x1xf32>
    %44 = math.rsqrt %43 : vector<8x1xf32>
    %45 = vector.broadcast %44 : vector<8x1xf32> to vector<8x64xf32>
    %46 = arith.mulf %36, %45 : vector<8x64xf32>
    %cst_21 = arith.constant 0.000000e+00 : f32
    %47 = vector.broadcast %cst_21 : f32 to vector<8x64xf32>
    %48 = arith.maximumf %46, %47 : vector<8x64xf32>
    %49 = arith.truncf %48 : vector<8x64xf32> to vector<8x64xbf16>
    %c0_22 = arith.constant 0 : index
    %c0_23 = arith.constant 0 : index
    %50 = vector.load %arg6[%c0_22, %c0_23] : memref<64x8xbf16, #tpu.memory_space<vmem>>, vector<64x8xbf16>
    %cst_24 = arith.constant dense<0.000000e+00> : vector<8x8xf32>
    %51 = tpu.matmul %49, %50, %cst_24 {dimension_numbers = #tpu.dot_dimension_numbers<[1], [0], [0], [1], [0, 0, 1, 1], [], []>} : vector<8x64xbf16>, vector<64x8xbf16>, vector<8x8xf32> -> vector<8x8xf32>
    %c0_25 = arith.constant 0 : index
    %c0_26 = arith.constant 0 : index
    %52 = vector.load %arg7[%c0_25, %c0_26] : memref<1x8xf32, #tpu.memory_space<vmem>>, vector<1x8xf32>
    %53 = vector.broadcast %52 : vector<1x8xf32> to vector<8x8xf32>
    %54 = arith.addf %51, %53 : vector<8x8xf32>
    %c0_27 = arith.constant 0 : index
    %c0_28 = arith.constant 0 : index
    %55 = vector.load %arg8[%c0_27, %c0_28] : memref<8x8xf32, #tpu.memory_space<vmem>>, vector<8x8xf32>
    tpu.vector_store %arg8[%c0_27, %c0_28], %54 {strides = array<i32>} : memref<8x8xf32, #tpu.memory_space<vmem>>, vector<8x8xf32>,
    return
  }
  func.func @transform_0(%arg0: i32) -> (i32, i32) {
    %c0_i32 = arith.constant 0 : i32
    %c0_i32_0 = arith.constant 0 : i32
    return %arg0, %c0_i32 : i32, i32
  }
  func.func @transform_1(%arg0: i32) -> (i32, i32) {
    %c0_i32 = arith.constant 0 : i32
    %c0_i32_0 = arith.constant 0 : i32
    %c0_i32_1 = arith.constant 0 : i32
    return %c0_i32, %c0_i32_0 : i32, i32
  }
  func.func @transform_2(%arg0: i32) -> (i32, i32) {
    %c0_i32 = arith.constant 0 : i32
    %c0_i32_0 = arith.constant 0 : i32
    %c0_i32_1 = arith.constant 0 : i32
    return %c0_i32, %c0_i32_0 : i32, i32
  }
  func.func @transform_3(%arg0: i32) -> (i32, i32) {
    %c0_i32 = arith.constant 0 : i32
    %c0_i32_0 = arith.constant 0 : i32
    %c0_i32_1 = arith.constant 0 : i32
    return %c0_i32, %c0_i32_0 : i32, i32
  }
  func.func @transform_4(%arg0: i32) -> (i32, i32) {
    %c0_i32 = arith.constant 0 : i32
    %c0_i32_0 = arith.constant 0 : i32
    %c0_i32_1 = arith.constant 0 : i32
    return %c0_i32, %c0_i32_0 : i32, i32
  }
  func.func @transform_5(%arg0: i32) -> (i32, i32) {
    %c0_i32 = arith.constant 0 : i32
    %c0_i32_0 = arith.constant 0 : i32
    %c0_i32_1 = arith.constant 0 : i32
    return %c0_i32, %c0_i32_0 : i32, i32
  }
  func.func @transform_6(%arg0: i32) -> (i32, i32) {
    %c0_i32 = arith.constant 0 : i32
    %c0_i32_0 = arith.constant 0 : i32
    %c0_i32_1 = arith.constant 0 : i32
    return %c0_i32, %c0_i32_0 : i32, i32
  }
  func.func @transform_7(%arg0: i32) -> (i32, i32) {
    %c0_i32 = arith.constant 0 : i32
    %c0_i32_0 = arith.constant 0 : i32
    return %arg0, %c0_i32 : i32, i32
  }
}

</mosaic_0001>

<llo_original>
// kernel: tpu_custom_call.1
$region0: #{tpu_custom_call.1}
  #allocation0 [shape = 'u32[]', space=smem, size = 0x4, offset = 0x4, fixed_abs, tag = 'smem constant byte address 0x4 - core index']
  #allocation1 [shape = 'u32[72,128]{1,0:T(1,128)}', space=vmem, size = 0x9000, scoped, tag = 'internal scratch']
  %s0 = inlined_call_operand.vmem [shape: f32[16,768], index: 0, kind: input, shape index: {}]
  %s1 = inlined_call_operand.hbm [shape: bf16[768,128], index: 1, kind: input, shape index: {}]
  %s2 = inlined_call_operand.vmem [shape: f32[1,128], index: 2, kind: input, shape index: {}]
  %s3 = inlined_call_operand.vmem [shape: bf16[128,64], index: 3, kind: input, shape index: {}]
  %s4 = inlined_call_operand.vmem [shape: f32[1,64], index: 4, kind: input, shape index: {}]
  %s5 = inlined_call_operand.vmem [shape: bf16[64,8], index: 5, kind: input, shape index: {}]
  %s6 = inlined_call_operand.vmem [shape: f32[1,8], index: 6, kind: input, shape index: {}]
  %s7 = inlined_call_operand.vmem [shape: f32[16,8], index: 7, kind: output, shape index: {}]
  %s8 = sld [smem:[#allocation0]]
  $region65: #{tpu_custom_call.1} parent=0
    _
  %s10 = ssub.s32 1, %s8
  %s11 = scalar_select 0, %s10, %s8
  $region1: #{tpu_custom_call.1} parent=0
    #allocation2 [shape = 'u8[196608]{0}', space=vmem, size = 0x30000, scoped, tag = 'input window, operand 1, single buffered']
    #allocation3 [shape = 's32[2]{0}', space=sflag, size = 0x8, scoped, tag = 'scoped memory for tpu_custom_call.1']
    %12 = vsyncpa [#allocation3], 0
    loop: start=0, step=1, limit=4
    $region2: #{tpu_custom_call.1} parent=1 // loop_pre_header
      _
    $region3: #{tpu_custom_call.1} parent=1 // loop_header
      %s14 = sphi 0, %s18
      %p15 = scmp.ge.s32.totalorder %s14, 4
      %s24 = sphi 0, %s26
      %s27 = sphi 0, %s24
      %s28 = sphi 0, %s27
      %s44 = sphi 0, %s28
      %s48 = sphi 0, %s48
      %s50 = sphi 0, %s48
      %s51 = sphi 0, %s50
      %s65 = sphi 0, %s51
      %s69 = sphi 0, %s69
      %s71 = sphi 0, %s69
      %s72 = sphi 0, %s71
      %s86 = sphi 0, %s72
      %s90 = sphi 0, %s90
      %s92 = sphi 0, %s90
      %s93 = sphi 0, %s92
      %s107 = sphi 0, %s93
      %s111 = sphi 0, %s111
      %s113 = sphi 0, %s111
      %s114 = sphi 0, %s113
      %s128 = sphi 0, %s114
      %s132 = sphi 0, %s132
      %s134 = sphi 0, %s132
      %s135 = sphi 0, %s134
      %s149 = sphi 0, %s135
      %s153 = sphi 0, %s153
      %s155 = sphi 0, %s153
      %s156 = sphi 0, %s155
      %s170 = sphi 0, %s156
      %s176 = sphi 0, %s178
      %s179 = sphi 0, %s176
      %s180 = sphi 0, %s179
      %s196 = sphi 0, %s180
    $region4: #{tpu_custom_call.1} parent=1 // loop_header_branch
      %17 = sbr.rel (%p15) target = $region8
    $region5: #{tpu_custom_call.1} parent=1 // loop_body
      %s19 = ssub.s32 %s14, 1
      %s20 = ssub.s32 %s14, 2
      %s21 = sadd.s32 %s14, 1
      %s22 = ssub.s32 %s14, %s21
      %p23 = scmp.eq.s32.totalorder %s22, 0
      %s25 = sadd.s32 %s24, 1
      %s26 = scalar_select %p23, %s24, %s25
      %p29 = pneg %p23
      %p30 = scmp.eq.s32.totalorder %s14, 1
      %p31 = por %p29, %p30
      %p32 = scmp.ne.s32.totalorder %s24, %s27
      %p33 = scmp.eq.s32.totalorder %s14, 0
      %p34 = por %p32, %p33
      %p35 = scmp.ne.s32.totalorder %s24, %s27
      %p36 = scmp.eq.s32.totalorder %s19, 1
      %p37 = por %p35, %p36
      %p38 = scmp.ne.s32.totalorder %s27, %s28
      %p39 = scmp.eq.s32.totalorder %s19, 0
      %p40 = por %p38, %p39
      %p41 = scmp.ne.s32.totalorder %s27, %s28
      %p42 = scmp.eq.s32.totalorder %s20, 1
      %p43 = por %p41, %p42
      %p45 = scmp.ne.s32.totalorder %s28, %s44
      %p46 = scmp.eq.s32.totalorder %s20, 0
      %p47 = por %p45, %p46
      %s49 = sadd.s32 %s48, 1
      %p52 = scmp.eq.s32.totalorder %s14, 1
      %p53 = scmp.ne.s32.totalorder %s48, %s50
      %p54 = scmp.eq.s32.totalorder %s14, 0
      %p55 = por %p53, %p54
      %p56 = scmp.ne.s32.totalorder %s48, %s50
      %p57 = scmp.eq.s32.totalorder %s19, 1
      %p58 = por %p56, %p57
      %p59 = scmp.ne.s32.totalorder %s50, %s51
      %p60 = scmp.eq.s32.totalorder %s19, 0
      %p61 = por %p59, %p60
      %p62 = scmp.ne.s32.totalorder %s50, %s51
      %p63 = scmp.eq.s32.totalorder %s20, 1
      %p64 = por %p62, %p63
      %p66 = scmp.ne.s32.totalorder %s51, %s65
      %p67 = scmp.eq.s32.totalorder %s20, 0
      %p68 = por %p66, %p67
      %s70 = sadd.s32 %s69, 1
      %p73 = scmp.eq.s32.totalorder %s14, 1
      %p74 = scmp.ne.s32.totalorder %s69, %s71
      %p75 = scmp.eq.s32.totalorder %s14, 0
      %p76 = por %p74, %p75
      %p77 = scmp.ne.s32.totalorder %s69, %s71
      %p78 = scmp.eq.s32.totalorder %s19, 1
      %p79 = por %p77, %p78
      %p80 = scmp.ne.s32.totalorder %s71, %s72
      %p81 = scmp.eq.s32.totalorder %s19, 0
      %p82 = por %p80, %p81
      %p83 = scmp.ne.s32.totalorder %s71, %s72
      %p84 = scmp.eq.s32.totalorder %s20, 1
      %p85 = por %p83, %p84
      %p87 = scmp.ne.s32.totalorder %s72, %s86
      %p88 = scmp.eq.s32.totalorder %s20, 0
      %p89 = por %p87, %p88
      %s91 = sadd.s32 %s90, 1
      %p94 = scmp.eq.s32.totalorder %s14, 1
      %p95 = scmp.ne.s32.totalorder %s90, %s92
      %p96 = scmp.eq.s32.totalorder %s14, 0
      %p97 = por %p95, %p96
      %p98 = scmp.ne.s32.totalorder %s90, %s92
      %p99 = scmp.eq.s32.totalorder %s19, 1
      %p100 = por %p98, %p99
      %p101 = scmp.ne.s32.totalorder %s92, %s93
      %p102 = scmp.eq.s32.totalorder %s19, 0
      %p103 = por %p101, %p102
      %p104 = scmp.ne.s32.totalorder %s92, %s93
      %p105 = scmp.eq.s32.totalorder %s20, 1
      %p106 = por %p104, %p105
      %p108 = scmp.ne.s32.totalorder %s93, %s107
      %p109 = scmp.eq.s32.totalorder %s20, 0
      %p110 = por %p108, %p109
      %s112 = sadd.s32 %s111, 1
      %p115 = scmp.eq.s32.totalorder %s14, 1
      %p116 = scmp.ne.s32.totalorder %s111, %s113
      %p117 = scmp.eq.s32.totalorder %s14, 0
      %p118 = por %p116, %p117
      %p119 = scmp.ne.s32.totalorder %s111, %s113
      %p120 = scmp.eq.s32.totalorder %s19, 1
      %p121 = por %p119, %p120
      %p122 = scmp.ne.s32.totalorder %s113, %s114
      %p123 = scmp.eq.s32.totalorder %s19, 0
      %p124 = por %p122, %p123
      %p125 = scmp.ne.s32.totalorder %s113, %s114
      %p126 = scmp.eq.s32.totalorder %s20, 1
      %p127 = por %p125, %p126
      %p129 = scmp.ne.s32.totalorder %s114, %s128
      %p130 = scmp.eq.s32.totalorder %s20, 0
      %p131 = por %p129, %p130
      %s133 = sadd.s32 %s132, 1
      %p136 = scmp.eq.s32.totalorder %s14, 1
      %p137 = scmp.ne.s32.totalorder %s132, %s134
      %p138 = scmp.eq.s32.totalorder %s14, 0
      %p139 = por %p137, %p138
      %p140 = scmp.ne.s32.totalorder %s132, %s134
      %p141 = scmp.eq.s32.totalorder %s19, 1
      %p142 = por %p140, %p141
      %p143 = scmp.ne.s32.totalorder %s134, %s135
      %p144 = scmp.eq.s32.totalorder %s19, 0
      %p145 = por %p143, %p144
      %p146 = scmp.ne.s32.totalorder %s134, %s135
      %p147 = scmp.eq.s32.totalorder %s20, 1
      %p148 = por %p146, %p147
      %p150 = scmp.ne.s32.totalorder %s135, %s149
      %p151 = scmp.eq.s32.totalorder %s20, 0
      %p152 = por %p150, %p151
      %s154 = sadd.s32 %s153, 1
      %p157 = scmp.eq.s32.totalorder %s14, 1
      %p158 = scmp.ne.s32.totalorder %s153, %s155
      %p159 = scmp.eq.s32.totalorder %s14, 0
      %p160 = por %p158, %p159
      %p161 = scmp.ne.s32.totalorder %s153, %s155
      %p162 = scmp.eq.s32.totalorder %s19, 1
      %p163 = por %p161, %p162
      %p164 = scmp.ne.s32.totalorder %s155, %s156
      %p165 = scmp.eq.s32.totalorder %s19, 0
      %p166 = por %p164, %p165
      %p167 = scmp.ne.s32.totalorder %s155, %s156
      %p168 = scmp.eq.s32.totalorder %s20, 1
      %p169 = por %p167, %p168
      %p171 = scmp.ne.s32.totalorder %s156, %s170
      %p172 = scmp.eq.s32.totalorder %s20, 0
      %p173 = por %p171, %p172
      %s174 = ssub.s32 %s14, %s21
      %p175 = scmp.eq.s32.totalorder %s174, 0
      %s177 = sadd.s32 %s176, 1
      %s178 = scalar_select %p175, %s176, %s177
      %p181 = pneg %p175
      %p182 = scmp.eq.s32.totalorder %s14, 1
      %p183 = por %p181, %p182
      %p184 = scmp.ne.s32.totalorder %s176, %s179
      %p185 = scmp.eq.s32.totalorder %s14, 0
      %p186 = por %p184, %p185
      %p187 = scmp.ne.s32.totalorder %s176, %s179
      %p188 = scmp.eq.s32.totalorder %s19, 1
      %p189 = por %p187, %p188
      %p190 = scmp.ne.s32.totalorder %s179, %s180
      %p191 = scmp.eq.s32.totalorder %s19, 0
      %p192 = por %p190, %p191
      %p193 = scmp.ne.s32.totalorder %s179, %s180
      %p194 = scmp.eq.s32.totalorder %s20, 1
      %p195 = por %p193, %p194
      %p197 = scmp.ne.s32.totalorder %s180, %s196
      %p198 = scmp.eq.s32.totalorder %s20, 0
      %p199 = por %p197, %p198
      %p200 = scmp.le.s32.totalorder 1, %s14
      %p201 = scmp.lt.s32.totalorder %s14, 3
      %p202 = pnand %p200, %p201
      %p203 = pneg %p202
      // Predicated region
      $region9: #{tpu_custom_call.1} parent=5 // pred_check
        _
      $region10: #{tpu_custom_call.1} parent=5 // pred_check_branch
        %205 = sbr.rel (%p202) target = $region12
      $region11: #{tpu_custom_call.1} parent=5 // pred_region
        %s206 = ssub.s32 %s14, 1
        // Predicated region
        $region13: #{tpu_custom_call.1} parent=11 // pred_check
          %p207 = pneg %p61
        $region14: #{tpu_custom_call.1} parent=11 // pred_check_branch
          %209 = sbr.rel (%p207) target = $region16
        $region15: #{tpu_custom_call.1} parent=11 // pred_region
          %211 = vsyncadd [#allocation3], 0
          %s212 = sshll.u32 %s1, 4
          %s213 = int_to_ptr.hbm [resolvable:$true] %s212
          %s214 = sshll.u32 [#allocation2], 4
          %s215 = int_to_ptr.vmem [resolvable:$true] %s214
          %220 = dma.hbm_to_vmem [thread:$0]  %s213, 6144, %s215, [#allocation3], 64, 64, 4
        $region16: #{tpu_custom_call.1} parent=11 // pred_fallthru
          _
        // Predicated region
        $region17: #{tpu_custom_call.1} parent=11 // pred_check
          %p221 = pneg %p82
        $region18: #{tpu_custom_call.1} parent=11 // pred_check_branch
          %223 = sbr.rel (%p221) target = $region20
        $region19: #{tpu_custom_call.1} parent=11 // pred_region
          _
        $region20: #{tpu_custom_call.1} parent=11 // pred_fallthru
          _
        // Predicated region
        $region21: #{tpu_custom_call.1} parent=11 // pred_check
          %p224 = pneg %p103
        $region22: #{tpu_custom_call.1} parent=11 // pred_check_branch
          %226 = sbr.rel (%p224) target = $region24
        $region23: #{tpu_custom_call.1} parent=11 // pred_region
          _
        $region24: #{tpu_custom_call.1} parent=11 // pred_fallthru
          _
        // Predicated region
        $region25: #{tpu_custom_call.1} parent=11 // pred_check
          %p227 = pneg %p124
        $region26: #{tpu_custom_call.1} parent=11 // pred_check_branch
          %229 = sbr.rel (%p227) target = $region28
        $region27: #{tpu_custom_call.1} parent=11 // pred_region
          _
        $region28: #{tpu_custom_call.1} parent=11 // pred_fallthru
          _
        // Predicated region
        $region29: #{tpu_custom_call.1} parent=11 // pred_check
          %p230 = pneg %p145
        $region30: #{tpu_custom_call.1} parent=11 // pred_check_branch
          %232 = sbr.rel (%p230) target = $region32
        $region31: #{tpu_custom_call.1} parent=11 // pred_region
          _
        $region32: #{tpu_custom_call.1} parent=11 // pred_fallthru
          _
        // Predicated region
        $region33: #{tpu_custom_call.1} parent=11 // pred_check
          %p233 = pneg %p166
        $region34: #{tpu_custom_call.1} parent=11 // pred_check_branch
          %235 = sbr.rel (%p233) target = $region36
        $region35: #{tpu_custom_call.1} parent=11 // pred_region
          _
        $region36: #{tpu_custom_call.1} parent=11 // pred_fallthru
          _
      $region12: #{tpu_custom_call.1} parent=5 // pred_fallthru
        _
      %p236 = scmp.lt.s32.totalorder %s14, 2
      // Predicated region
      $region37: #{tpu_custom_call.1} parent=5 // pred_check
        %p237 = pneg %p236
      $region38: #{tpu_custom_call.1} parent=5 // pred_check_branch
        %239 = sbr.rel (%p237) target = $region40
      $region39: #{tpu_custom_call.1} parent=5 // pred_region
        // Predicated region
        $region41: #{tpu_custom_call.1} parent=39 // pred_check
          %p240 = pneg %p34
        $region42: #{tpu_custom_call.1} parent=39 // pred_check_branch
          %242 = sbr.rel (%p240) target = $region44
        $region43: #{tpu_custom_call.1} parent=39 // pred_region
          %p243 = scmp.lt.s32.totalorder %s14, 1
          %s244 = scalar_select %p243, %s14, 1
          %s245 = smul.addr %s244, 6
          %s246 = smul.addr %s245, 8
          %s247 = scalar_lea.vmem %s0, %s246
        $region44: #{tpu_custom_call.1} parent=39 // pred_fallthru
          _
      $region40: #{tpu_custom_call.1} parent=5 // pred_fallthru
        _
      %p248 = scmp.le.s32.totalorder 1, %s14
      %p249 = scmp.lt.s32.totalorder %s14, 3
      %p250 = pnand %p248, %p249
      %p251 = pneg %p250
      // Predicated region
      $region45: #{tpu_custom_call.1} parent=5 // pred_check
        _
      $region46: #{tpu_custom_call.1} parent=5 // pred_check_branch
        %253 = sbr.rel (%p250) target = $region48
      $region47: #{tpu_custom_call.1} parent=5 // pred_region
        %s254 = ssub.s32 %s14, 1
        // Predicated region
        $region49: #{tpu_custom_call.1} parent=47 // pred_check
          %p255 = pneg %p61
        $region50: #{tpu_custom_call.1} parent=47 // pred_check_branch
          %257 = sbr.rel (%p255) target = $region52
        $region51: #{tpu_custom_call.1} parent=47 // pred_region
          %259 = dma.done [#allocation3], 6144
        $region52: #{tpu_custom_call.1} parent=47 // pred_fallthru
          _
        %p260 = scmp.lt.s32.totalorder %s19, 1
        %s261 = scalar_select %p260, %s19, 1
        %s262 = smul.addr %s261, 6
        %s263 = smul.addr %s262, 8
        %s264 = scalar_lea.vmem %s0, %s263
        %p265 = pneg %p40
        %p266 = pneg %p37
        %p267 = pneg %p61
        %p268 = pneg %p58
        %p269 = pneg %p82
        %p270 = pneg %p79
        %p271 = pneg %p103
        %p272 = pneg %p100
        %p273 = pneg %p124
        %p274 = pneg %p121
        %p275 = pneg %p145
        %p276 = pneg %p142
        %p277 = pneg %p166
        %p278 = pneg %p163
        %p279 = pneg %p192
        %p280 = pneg %p189
        %p281 = scmp.lt.s32.totalorder %s19, 1
        %s282 = scalar_select %p281, %s19, 1
        %s283 = smul.addr %s282, 8
        %s284 = scalar_lea.vmem %s7, %s283
        %p285 = scmp.lt.s32.totalorder %s19, 1
        %s286 = scalar_select %p285, %s19, 1
        %s287 = smul.addr %s286, 6
        %s288 = smul.addr %s287, 8
        %s289 = scalar_lea.vmem %s0, %s288
        %p290 = scmp.lt.s32.totalorder %s19, 1
        %s291 = scalar_select %p290, %s19, 1
        %s292 = smul.addr %s291, 8
        %s293 = scalar_lea.vmem %s7, %s292
        %v295 = vld [vmem:[%s289] sm:$0xff]
        %v296 = vld [vmem:[%s289 + $0x8] sm:$0xff]
        %v297 = vld [vmem:[%s289 + $0x10] sm:$0xff]
        %v298 = vld [vmem:[%s289 + $0x18] sm:$0xff]
        %v299 = vld [vmem:[%s289 + $0x20] sm:$0xff]
        %v300 = vld [vmem:[%s289 + $0x28] sm:$0xff]
        %v301 = vpack.c.bf16 %v295, %v295
        %v302 = vpack.c.bf16 %v296, %v296
        %v303 = vpack.c.bf16 %v297, %v297
        %v304 = vpack.c.bf16 %v298, %v298
        %v305 = vpack.c.bf16 %v299, %v299
        %v306 = vpack.c.bf16 %v300, %v300
        %v307 = vld [vmem:[#allocation2] sm:$0xf]
        %v308 = vld [vmem:[#allocation2 + $0x4] sm:$0xf]
        %v309 = vld [vmem:[#allocation2 + $0x8] sm:$0xf]
        %v310 = vld [vmem:[#allocation2 + $0xc] sm:$0xf]
        %v311 = vld [vmem:[#allocation2 + $0x10] sm:$0xf]
        %v312 = vld [vmem:[#allocation2 + $0x14] sm:$0xf]
        %v313 = vld [vmem:[#allocation2 + $0x18] sm:$0xf]
        %v314 = vld [vmem:[#allocation2 + $0x1c] sm:$0xf]
        %v315 = vld [vmem:[#allocation2 + $0x20] sm:$0xf]
        %v316 = vld [vmem:[#allocation2 + $0x24] sm:$0xf]
        %v317 = vld [vmem:[#allocation2 + $0x28] sm:$0xf]
        %v318 = vld [vmem:[#allocation2 + $0x2c] sm:$0xf]
        %v319 = vld [vmem:[#allocation2 + $0x30] sm:$0xf]
        %v320 = vld [vmem:[#allocation2 + $0x34] sm:$0xf]
        %v321 = vld [vmem:[#allocation2 + $0x38] sm:$0xf]
        %v322 = vld [vmem:[#allocation2 + $0x3c] sm:$0xf]
        %v323 = vld [vmem:[#allocation2 + $0x40] sm:$0xf]
        %v324 = vld [vmem:[#allocation2 + $0x44] sm:$0xf]
        %v325 = vld [vmem:[#allocation2 + $0x48] sm:$0xf]
        %v326 = vld [vmem:[#allocation2 + $0x4c] sm:$0xf]
        %v327 = vld [vmem:[#allocation2 + $0x50] sm:$0xf]
        %v328 = vld [vmem:[#allocation2 + $0x54] sm:$0xf]
        %v329 = vld [vmem:[#allocation2 + $0x58] sm:$0xf]
        %v330 = vld [vmem:[#allocation2 + $0x5c] sm:$0xf]
        %v331 = vld [vmem:[#allocation2 + $0x60] sm:$0xf]
        %v332 = vld [vmem:[#allocation2 + $0x64] sm:$0xf]
        %v333 = vld [vmem:[#allocation2 + $0x68] sm:$0xf]
        %v334 = vld [vmem:[#allocation2 + $0x6c] sm:$0xf]
        %v335 = vld [vmem:[#allocation2 + $0x70] sm:$0xf]
        %v336 = vld [vmem:[#allocation2 + $0x74] sm:$0xf]
        %v337 = vld [vmem:[#allocation2 + $0x78] sm:$0xf]
        %v338 = vld [vmem:[#allocation2 + $0x7c] sm:$0xf]
        %v339 = vld [vmem:[#allocation2 + $0x80] sm:$0xf]
        %v340 = vld [vmem:[#allocation2 + $0x84] sm:$0xf]
        %v341 = vld [vmem:[#allocation2 + $0x88] sm:$0xf]
        %v342 = vld [vmem:[#allocation2 + $0x8c] sm:$0xf]
        %v343 = vld [vmem:[#allocation2 + $0x90] sm:$0xf]
        %v344 = vld [vmem:[#allocation2 + $0x94] sm:$0xf]
        %v345 = vld [vmem:[#allocation2 + $0x98] sm:$0xf]
        %v346 = vld [vmem:[#allocation2 + $0x9c] sm:$0xf]
        %v347 = vld [vmem:[#allocation2 + $0xa0] sm:$0xf]
        %v348 = vld [vmem:[#allocation2 + $0xa4] sm:$0xf]
        %v349 = vld [vmem:[#allocation2 + $0xa8] sm:$0xf]
        %v350 = vld [vmem:[#allocation2 + $0xac] sm:$0xf]
        %v351 = vld [vmem:[#allocation2 + $0xb0] sm:$0xf]
        %v352 = vld [vmem:[#allocation2 + $0xb4] sm:$0xf]
        %v353 = vld [vmem:[#allocation2 + $0xb8] sm:$0xf]
        %v354 = vld [vmem:[#allocation2 + $0xbc] sm:$0xf]
        %v355 = vld [vmem:[#allocation2 + $0xc0] sm:$0xf]
        %v356 = vld [vmem:[#allocation2 + $0xc4] sm:$0xf]
        %v357 = vld [vmem:[#allocation2 + $0xc8] sm:$0xf]
        %v358 = vld [vmem:[#allocation2 + $0xcc] sm:$0xf]
        %v359 = vld [vmem:[#allocation2 + $0xd0] sm:$0xf]
        %v360 = vld [vmem:[#allocation2 + $0xd4] sm:$0xf]
        %v361 = vld [vmem:[#allocation2 + $0xd8] sm:$0xf]
        %v362 = vld [vmem:[#allocation2 + $0xdc] sm:$0xf]
        %v363 = vld [vmem:[#allocation2 + $0xe0] sm:$0xf]
        %v364 = vld [vmem:[#allocation2 + $0xe4] sm:$0xf]
        %v365 = vld [vmem:[#allocation2 + $0xe8] sm:$0xf]
        %v366 = vld [vmem:[#allocation2 + $0xec] sm:$0xf]
        %v367 = vld [vmem:[#allocation2 + $0xf0] sm:$0xf]
        %v368 = vld [vmem:[#allocation2 + $0xf4] sm:$0xf]
        %v369 = vld [vmem:[#allocation2 + $0xf8] sm:$0xf]
        %v370 = vld [vmem:[#allocation2 + $0xfc] sm:$0xf]
        %v371 = vld [vmem:[#allocation2 + $0x100] sm:$0xf]
        %v372 = vld [vmem:[#allocation2 + $0x104] sm:$0xf]
        %v373 = vld [vmem:[#allocation2 + $0x108] sm:$0xf]
        %v374 = vld [vmem:[#allocation2 + $0x10c] sm:$0xf]
        %v375 = vld [vmem:[#allocation2 + $0x110] sm:$0xf]
        %v376 = vld [vmem:[#allocation2 + $0x114] sm:$0xf]
        %v377 = vld [vmem:[#allocation2 + $0x118] sm:$0xf]
        %v378 = vld [vmem:[#allocation2 + $0x11c] sm:$0xf]
        %v379 = vld [vmem:[#allocation2 + $0x120] sm:$0xf]
        %v380 = vld [vmem:[#allocation2 + $0x124] sm:$0xf]
        %v381 = vld [vmem:[#allocation2 + $0x128] sm:$0xf]
        %v382 = vld [vmem:[#allocation2 + $0x12c] sm:$0xf]
        %v383 = vld [vmem:[#allocation2 + $0x130] sm:$0xf]
        %v384 = vld [vmem:[#allocation2 + $0x134] sm:$0xf]
        %v385 = vld [vmem:[#allocation2 + $0x138] sm:$0xf]
        %v386 = vld [vmem:[#allocation2 + $0x13c] sm:$0xf]
        %v387 = vld [vmem:[#allocation2 + $0x140] sm:$0xf]
        %v388 = vld [vmem:[#allocation2 + $0x144] sm:$0xf]
        %v389 = vld [vmem:[#allocation2 + $0x148] sm:$0xf]
        %v390 = vld [vmem:[#allocation2 + $0x14c] sm:$0xf]
        %v391 = vld [vmem:[#allocation2 + $0x150] sm:$0xf]
        %v392 = vld [vmem:[#allocation2 + $0x154] sm:$0xf]
        %v393 = vld [vmem:[#allocation2 + $0x158] sm:$0xf]
        %v394 = vld [vmem:[#allocation2 + $0x15c] sm:$0xf]
        %v395 = vld [vmem:[#allocation2 + $0x160] sm:$0xf]
        %v396 = vld [vmem:[#allocation2 + $0x164] sm:$0xf]
        %v397 = vld [vmem:[#allocation2 + $0x168] sm:$0xf]
        %v398 = vld [vmem:[#allocation2 + $0x16c] sm:$0xf]
        %v399 = vld [vmem:[#allocation2 + $0x170] sm:$0xf]
        %v400 = vld [vmem:[#allocation2 + $0x174] sm:$0xf]
        %v401 = vld [vmem:[#allocation2 + $0x178] sm:$0xf]
        %v402 = vld [vmem:[#allocation2 + $0x17c] sm:$0xf]
        %v403 = vld [vmem:[%s2] sm:$0x1]
        %v405 = vperm.slane %v403, 0
        %v503 = vunpack.c.l.b16 %v307
        %v504 = vunpack.c.l.b16 %v308
        %v505 = vunpack.c.l.b16 %v309
        %v506 = vunpack.c.l.b16 %v310
        %v507 = vunpack.c.l.b16 %v311
        %v508 = vunpack.c.l.b16 %v312
        %v509 = vunpack.c.l.b16 %v313
        %v510 = vunpack.c.l.b16 %v314
        %v511 = vunpack.c.l.b16 %v315
        %v512 = vunpack.c.l.b16 %v316
        %v513 = vunpack.c.l.b16 %v317
        %v514 = vunpack.c.l.b16 %v318
        %v515 = vunpack.c.l.b16 %v319
        %v516 = vunpack.c.l.b16 %v320
        %v517 = vunpack.c.l.b16 %v321
        %v518 = vunpack.c.l.b16 %v322
        %v519 = vunpack.c.l.b16 %v323
        %v520 = vunpack.c.l.b16 %v324
        %v521 = vunpack.c.l.b16 %v325
        %v522 = vunpack.c.l.b16 %v326
        %v523 = vunpack.c.l.b16 %v327
        %v524 = vunpack.c.l.b16 %v328
        %v525 = vunpack.c.l.b16 %v329
        %v526 = vunpack.c.l.b16 %v330
        %v527 = vunpack.c.l.b16 %v331
        %v528 = vunpack.c.l.b16 %v332
        %v529 = vunpack.c.l.b16 %v333
        %v530 = vunpack.c.l.b16 %v334
        %v531 = vunpack.c.l.b16 %v335
        %v532 = vunpack.c.l.b16 %v336
        %v533 = vunpack.c.l.b16 %v337
        %v534 = vunpack.c.l.b16 %v338
        %v535 = vunpack.c.l.b16 %v339
        %v536 = vunpack.c.l.b16 %v340
        %v537 = vunpack.c.l.b16 %v341
        %v538 = vunpack.c.l.b16 %v342
        %v539 = vunpack.c.l.b16 %v343
        %v540 = vunpack.c.l.b16 %v344
        %v541 = vunpack.c.l.b16 %v345
        %v542 = vunpack.c.l.b16 %v346
        %v543 = vunpack.c.l.b16 %v347
        %v544 = vunpack.c.l.b16 %v348
        %v545 = vunpack.c.l.b16 %v349
        %v546 = vunpack.c.l.b16 %v350
        %v547 = vunpack.c.l.b16 %v351
        %v548 = vunpack.c.l.b16 %v352
        %v549 = vunpack.c.l.b16 %v353
        %v550 = vunpack.c.l.b16 %v354
        %v551 = vunpack.c.l.b16 %v355
        %v552 = vunpack.c.l.b16 %v356
        %v553 = vunpack.c.l.b16 %v357
        %v554 = vunpack.c.l.b16 %v358
        %v555 = vunpack.c.l.b16 %v359
        %v556 = vunpack.c.l.b16 %v360
        %v557 = vunpack.c.l.b16 %v361
        %v558 = vunpack.c.l.b16 %v362
        %v559 = vunpack.c.l.b16 %v363
        %v560 = vunpack.c.l.b16 %v364
        %v561 = vunpack.c.l.b16 %v365
        %v562 = vunpack.c.l.b16 %v366
        %v563 = vunpack.c.l.b16 %v367
        %v564 = vunpack.c.l.b16 %v368
        %v565 = vunpack.c.l.b16 %v369
        %v566 = vunpack.c.l.b16 %v370
        %v567 = vunpack.c.l.b16 %v371
        %v568 = vunpack.c.l.b16 %v372
        %v569 = vunpack.c.l.b16 %v373
        %v570 = vunpack.c.l.b16 %v374
        %v571 = vunpack.c.l.b16 %v375
        %v572 = vunpack.c.l.b16 %v376
        %v573 = vunpack.c.l.b16 %v377
        %v574 = vunpack.c.l.b16 %v378
        %v575 = vunpack.c.l.b16 %v379
        %v576 = vunpack.c.l.b16 %v380
        %v577 = vunpack.c.l.b16 %v381
        %v578 = vunpack.c.l.b16 %v382
        %v579 = vunpack.c.l.b16 %v383
        %v580 = vunpack.c.l.b16 %v384
        %v581 = vunpack.c.l.b16 %v385
        %v582 = vunpack.c.l.b16 %v386
        %v583 = vunpack.c.l.b16 %v387
        %v584 = vunpack.c.l.b16 %v388
        %v585 = vunpack.c.l.b16 %v389
        %v586 = vunpack.c.l.b16 %v390
        %v587 = vunpack.c.l.b16 %v391
        %v588 = vunpack.c.l.b16 %v392
        %v589 = vunpack.c.l.b16 %v393
        %v590 = vunpack.c.l.b16 %v394
        %v591 = vunpack.c.l.b16 %v395
        %v592 = vunpack.c.l.b16 %v396
        %v593 = vunpack.c.l.b16 %v397
        %v594 = vunpack.c.l.b16 %v398
        %v595 = vunpack.c.l.b16 %v399
        %v596 = vunpack.c.l.b16 %v400
        %v597 = vunpack.c.l.b16 %v401
        %v598 = vunpack.c.l.b16 %v402
        %v599 = vpack.c.b16 %v504, %v503
        %v600 = vpack.c.b16 %v506, %v505
        %v601 = vpack.c.b16 %v508, %v507
        %v602 = vpack.c.b16 %v510, %v509
        %v603 = vpack.c.b16 %v512, %v511
        %v604 = vpack.c.b16 %v514, %v513
        %v605 = vpack.c.b16 %v516, %v515
        %v606 = vpack.c.b16 %v518, %v517
        %v607 = vpack.c.b16 %v520, %v519
        %v608 = vpack.c.b16 %v522, %v521
        %v609 = vpack.c.b16 %v524, %v523
        %v610 = vpack.c.b16 %v526, %v525
        %v611 = vpack.c.b16 %v528, %v527
        %v612 = vpack.c.b16 %v530, %v529
        %v613 = vpack.c.b16 %v532, %v531
        %v614 = vpack.c.b16 %v534, %v533
        %v615 = vpack.c.b16 %v536, %v535
        %v616 = vpack.c.b16 %v538, %v537
        %v617 = vpack.c.b16 %v540, %v539
        %v618 = vpack.c.b16 %v542, %v541
        %v619 = vpack.c.b16 %v544, %v543
        %v620 = vpack.c.b16 %v546, %v545
        %v621 = vpack.c.b16 %v548, %v547
        %v622 = vpack.c.b16 %v550, %v549
        %v623 = vpack.c.b16 %v552, %v551
        %v624 = vpack.c.b16 %v554, %v553
        %v625 = vpack.c.b16 %v556, %v555
        %v626 = vpack.c.b16 %v558, %v557
        %v627 = vpack.c.b16 %v560, %v559
        %v628 = vpack.c.b16 %v562, %v561
        %v629 = vpack.c.b16 %v564, %v563
        %v630 = vpack.c.b16 %v566, %v565
        %v631 = vpack.c.b16 %v568, %v567
        %v632 = vpack.c.b16 %v570, %v569
        %v633 = vpack.c.b16 %v572, %v571
        %v634 = vpack.c.b16 %v574, %v573
        %v635 = vpack.c.b16 %v576, %v575
        %v636 = vpack.c.b16 %v578, %v577
        %v637 = vpack.c.b16 %v580, %v579
        %v638 = vpack.c.b16 %v582, %v581
        %v639 = vpack.c.b16 %v584, %v583
        %v640 = vpack.c.b16 %v586, %v585
        %v641 = vpack.c.b16 %v588, %v587
        %v642 = vpack.c.b16 %v590, %v589
        %v643 = vpack.c.b16 %v592, %v591
        %v644 = vpack.c.b16 %v594, %v593
        %v645 = vpack.c.b16 %v596, %v595
        %v646 = vpack.c.b16 %v598, %v597
        %695 = vmatpush.bf16.msra.mxu0 %v606
        %696 = vmatpush.bf16.msra.mxu0 %v605
        %697 = vmatpush.bf16.msra.mxu0 %v604
        %698 = vmatpush.bf16.msra.mxu0 %v603
        %699 = vmatpush.bf16.msra.mxu0 %v602
        %700 = vmatpush.bf16.msra.mxu0 %v601
        %701 = vmatpush.bf16.msra.mxu0 %v600
        %702 = vmatpush.bf16.msra.mxu0 %v599
        %703 = vmatmul.bf16.gmra.mxu0 %v301
        %v704 = vpop.f32.mrf.mxu0
        %v705 = vadd.f32 %v405, %v704
        %v706 = vpop.f32.mrf.mxu0
        %707 = vdwg.mxu0
        %708 = vmatpush.bf16.msra.mxu0 %v614
        %709 = vmatpush.bf16.msra.mxu0 %v613
        %710 = vmatpush.bf16.msra.mxu0 %v612
        %711 = vmatpush.bf16.msra.mxu0 %v611
        %712 = vmatpush.bf16.msra.mxu0 %v610
        %713 = vmatpush.bf16.msra.mxu0 %v609
        %714 = vmatpush.bf16.msra.mxu0 %v608
        %715 = vmatpush.bf16.msra.mxu0 %v607
        %716 = vmatmul.bf16.gmra.mxu0 %v302
        %v717 = vpop.f32.mrf.mxu0
        %v718 = vadd.f32 %v705, %v717
        %v719 = vpop.f32.mrf.mxu0
        %720 = vdwg.mxu0
        %721 = vmatpush.bf16.msra.mxu0 %v622
        %722 = vmatpush.bf16.msra.mxu0 %v621
        %723 = vmatpush.bf16.msra.mxu0 %v620
        %724 = vmatpush.bf16.msra.mxu0 %v619
        %725 = vmatpush.bf16.msra.mxu0 %v618
        %726 = vmatpush.bf16.msra.mxu0 %v617
        %727 = vmatpush.bf16.msra.mxu0 %v616
        %728 = vmatpush.bf16.msra.mxu0 %v615
        %729 = vmatmul.bf16.gmra.mxu0 %v303
        %v730 = vpop.f32.mrf.mxu0
        %v731 = vadd.f32 %v718, %v730
        %v732 = vpop.f32.mrf.mxu0
        %733 = vdwg.mxu0
        %734 = vmatpush.bf16.msra.mxu0 %v630
        %735 = vmatpush.bf16.msra.mxu0 %v629
        %736 = vmatpush.bf16.msra.mxu0 %v628
        %737 = vmatpush.bf16.msra.mxu0 %v627
        %738 = vmatpush.bf16.msra.mxu0 %v626
        %739 = vmatpush.bf16.msra.mxu0 %v625
        %740 = vmatpush.bf16.msra.mxu0 %v624
        %741 = vmatpush.bf16.msra.mxu0 %v623
        %742 = vmatmul.bf16.gmra.mxu0 %v304
        %v743 = vpop.f32.mrf.mxu0
        %v744 = vadd.f32 %v731, %v743
        %v745 = vpop.f32.mrf.mxu0
        %746 = vdwg.mxu0
        %747 = vmatpush.bf16.msra.mxu0 %v638
        %748 = vmatpush.bf16.msra.mxu0 %v637
        %749 = vmatpush.bf16.msra.mxu0 %v636
        %750 = vmatpush.bf16.msra.mxu0 %v635
        %751 = vmatpush.bf16.msra.mxu0 %v634
        %752 = vmatpush.bf16.msra.mxu0 %v633
        %753 = vmatpush.bf16.msra.mxu0 %v632
        %754 = vmatpush.bf16.msra.mxu0 %v631
        %755 = vmatmul.bf16.gmra.mxu0 %v305
        %v756 = vpop.f32.mrf.mxu0
        %v757 = vadd.f32 %v744, %v756
        %v758 = vpop.f32.mrf.mxu0
        %759 = vdwg.mxu0
        %760 = vmatpush.bf16.msra.mxu0 %v646
        %761 = vmatpush.bf16.msra.mxu0 %v645
        %762 = vmatpush.bf16.msra.mxu0 %v644
        %763 = vmatpush.bf16.msra.mxu0 %v643
        %764 = vmatpush.bf16.msra.mxu0 %v642
        %765 = vmatpush.bf16.msra.mxu0 %v641
        %766 = vmatpush.bf16.msra.mxu0 %v640
        %767 = vmatpush.bf16.msra.mxu0 %v639
        %768 = vmatmul.bf16.gmra.mxu0 %v306
        %v769 = vpop.f32.mrf.mxu0
        %v770 = vadd.f32 %v757, %v769
        %v771 = vpop.f32.mrf.mxu0
        %772 = vdwg.mxu0
        %773 = vadd.xlane.f32.xlu0 %v770
        %v774 = vpop.xlane.xlu0 %773
        %v775 = vrcp.pop 128.0
        %v776 = vmul.f32 128.0, %v775
        %v777 = vsub.f32 1.0, %v776
        %v778 = vmul.f32 %v775, %v777
        %v779 = vadd.f32 %v775, %v778
        %vm780 = vweird.f32 %v775
        %v781 = vsel %vm780, %v775, %v779
        %v782 = vmul.f32 %v774, %v781
        %v783 = vsub.f32 %v770, %v782
        %v784 = vmul.f32 %v783, %v783
        %785 = vadd.xlane.f32.xlu0 %v784
        %v786 = vpop.xlane.xlu0 %785
        %v787 = vmul.f32 %v786, %v781
        %v788 = vadd.f32 %v787, 1e-05
        %v789 = vrsqrt.pop %v788
        %v790 = vmul.f32 %v789, %v788
        %v791 = vmul.f32 %v790, %v789
        %v792 = vmul.f32 0.5, %v791
        %v793 = vsub.f32 1.5, %v792
        %v794 = vmul.f32 %v789, %v793
        %vm795 = vweird.f32 %v788
        %vm796 = vweird.f32 %v789
        %vm797 = vmor %vm795, %vm796
        %v798 = vsel %vm797, %v789, %v794
        %v799 = vmul.f32 %v783, %v798
        %v800 = vmax.f32 %v799, 0.0
        %v801 = vpack.c.bf16 %v800, %v800
        %v802 = vld [vmem:[%s3] sm:$0xf]
        %v803 = vld [vmem:[%s3 + $0x4] sm:$0xf]
        %v804 = vld [vmem:[%s3 + $0x8] sm:$0xf]
        %v805 = vld [vmem:[%s3 + $0xc] sm:$0xf]
        %v806 = vld [vmem:[%s3 + $0x10] sm:$0xf]
        %v807 = vld [vmem:[%s3 + $0x14] sm:$0xf]
        %v808 = vld [vmem:[%s3 + $0x18] sm:$0xf]
        %v809 = vld [vmem:[%s3 + $0x1c] sm:$0xf]
        %v810 = vld [vmem:[%s3 + $0x20] sm:$0xf]
        %v811 = vld [vmem:[%s3 + $0x24] sm:$0xf]
        %v812 = vld [vmem:[%s3 + $0x28] sm:$0xf]
        %v813 = vld [vmem:[%s3 + $0x2c] sm:$0xf]
        %v814 = vld [vmem:[%s3 + $0x30] sm:$0xf]
        %v815 = vld [vmem:[%s3 + $0x34] sm:$0xf]
        %v816 = vld [vmem:[%s3 + $0x38] sm:$0xf]
        %v817 = vld [vmem:[%s3 + $0x3c] sm:$0xf]
        %v818 = vld [vmem:[%s4] sm:$0x1]
        %v820 = vperm.slane %v818, 0
        %v838 = vunpack.c.l.b16 %v802
        %v839 = vunpack.c.l.b16 %v803
        %v840 = vunpack.c.l.b16 %v804
        %v841 = vunpack.c.l.b16 %v805
        %v842 = vunpack.c.l.b16 %v806
        %v843 = vunpack.c.l.b16 %v807
        %v844 = vunpack.c.l.b16 %v808
        %v845 = vunpack.c.l.b16 %v809
        %v846 = vunpack.c.l.b16 %v810
        %v847 = vunpack.c.l.b16 %v811
        %v848 = vunpack.c.l.b16 %v812
        %v849 = vunpack.c.l.b16 %v813
        %v850 = vunpack.c.l.b16 %v814
        %v851 = vunpack.c.l.b16 %v815
        %v852 = vunpack.c.l.b16 %v816
        %v853 = vunpack.c.l.b16 %v817
        %v854 = vpack.c.b16 %v839, %v838
        %v855 = vpack.c.b16 %v841, %v840
        %v856 = vpack.c.b16 %v843, %v842
        %v857 = vpack.c.b16 %v845, %v844
        %v858 = vpack.c.b16 %v847, %v846
        %v859 = vpack.c.b16 %v849, %v848
        %v860 = vpack.c.b16 %v851, %v850
        %v861 = vpack.c.b16 %v853, %v852
        %870 = vmatpush.bf16.msra.mxu0 %v861
        %871 = vmatpush.bf16.msra.mxu0 %v860
        %872 = vmatpush.bf16.msra.mxu0 %v859
        %873 = vmatpush.bf16.msra.mxu0 %v858
        %874 = vmatpush.bf16.msra.mxu0 %v857
        %875 = vmatpush.bf16.msra.mxu0 %v856
        %876 = vmatpush.bf16.msra.mxu0 %v855
        %877 = vmatpush.bf16.msra.mxu0 %v854
        %878 = vmatmul.bf16.gmra.mxu0 %v801
        %v879 = vpop.f32.mrf.mxu0
        %v880 = vadd.f32 %v820, %v879
        %v881 = vpop.f32.mrf.mxu0
        %882 = vdwg.mxu0
        %vm883 = vcmask 523264
        %v884 = vsel %vm883, %v880, 0.0
        %885 = vadd.xlane.f32.xlu0 %v884
        %v886 = vpop.xlane.xlu0 %885
        %v887 = vrcp.pop 64.0
        %v888 = vmul.f32 64.0, %v887
        %v889 = vsub.f32 1.0, %v888
        %v890 = vmul.f32 %v887, %v889
        %v891 = vadd.f32 %v887, %v890
        %vm892 = vweird.f32 %v887
        %v893 = vsel %vm892, %v887, %v891
        %v894 = vmul.f32 %v886, %v893
        %v895 = vsub.f32 %v880, %v894
        %v896 = vmul.f32 %v895, %v895
        %v897 = vsel %vm883, %v896, 0.0
        %898 = vadd.xlane.f32.xlu0 %v897
        %v899 = vpop.xlane.xlu0 %898
        %v900 = vmul.f32 %v899, %v893
        %v901 = vadd.f32 %v900, 1e-05
        %v902 = vrsqrt.pop %v901
        %v903 = vmul.f32 %v902, %v901
        %v904 = vmul.f32 %v903, %v902
        %v905 = vmul.f32 0.5, %v904
        %v906 = vsub.f32 1.5, %v905
        %v907 = vmul.f32 %v902, %v906
        %vm908 = vweird.f32 %v901
        %vm909 = vweird.f32 %v902
        %vm910 = vmor %vm908, %vm909
        %v911 = vsel %vm910, %v902, %v907
        %v912 = vmul.f32 %v895, %v911
        %v913 = vmax.f32 %v912, 0.0
        %v914 = vpack.c.bf16 %v913, %v913
        %v915 = vld [vmem:[%s5] sm:$0xf]
        %v916 = vld [vmem:[%s5 + $0x4] sm:$0xf]
        %v917 = vld [vmem:[%s5 + $0x8] sm:$0xf]
        %v918 = vld [vmem:[%s5 + $0xc] sm:$0xf]
        %v919 = vld [vmem:[%s5 + $0x10] sm:$0xf]
        %v920 = vld [vmem:[%s5 + $0x14] sm:$0xf]
        %v921 = vld [vmem:[%s5 + $0x18] sm:$0xf]
        %v922 = vld [vmem:[%s5 + $0x1c] sm:$0xf]
        %v923 = vld [vmem:[%s6] sm:$0x1]
        %v925 = vperm.slane %v923, 0
        %v935 = vunpack.c.l.b16 %v915
        %v936 = vunpack.c.l.b16 %v916
        %v937 = vunpack.c.l.b16 %v917
        %v938 = vunpack.c.l.b16 %v918
        %v939 = vunpack.c.l.b16 %v919
        %v940 = vunpack.c.l.b16 %v920
        %v941 = vunpack.c.l.b16 %v921
        %v942 = vunpack.c.l.b16 %v922
        %v943 = vpack.c.b16 %v936, %v935
        %v944 = vpack.c.b16 %v938, %v937
        %v945 = vpack.c.b16 %v940, %v939
        %v946 = vpack.c.b16 %v942, %v941
        %v952 = vsel %vm883, %v914, 0
        %954 = vmatpush.bf16.msra.mxu0 0
        %955 = vmatpush.bf16.msra.mxu0 0
        %956 = vmatpush.bf16.msra.mxu0 0
        %957 = vmatpush.bf16.msra.mxu0 0
        %958 = vmatpush.bf16.msra.mxu0 %v946
        %959 = vmatpush.bf16.msra.mxu0 %v945
        %960 = vmatpush.bf16.msra.mxu0 %v944
        %961 = vmatpush.bf16.msra.mxu0 %v943
        %962 = vmatmul.bf16.gmra.mxu0 %v952
        %v963 = vpop.f32.mrf.mxu0
        %v964 = vadd.f32 %v925, %v963
        %v965 = vpop.f32.mrf.mxu0
        %966 = vdwg.mxu0
        %vm967 = vcmask 64512
        %968 = vst.msk [vmem:[%s293] sm:$0xff] %vm967, %v964
        %p969 = scmp.lt.s32.totalorder %s19, 1
        %s970 = scalar_select %p969, %s19, 1
        %s971 = smul.addr %s970, 8
        %s972 = scalar_lea.vmem %s7, %s971
        // Predicated region
        $region53: #{tpu_custom_call.1} parent=47 // pred_check
          %p973 = pneg %p189
        $region54: #{tpu_custom_call.1} parent=47 // pred_check_branch
          %975 = sbr.rel (%p973) target = $region56
        $region55: #{tpu_custom_call.1} parent=47 // pred_region
          _
        $region56: #{tpu_custom_call.1} parent=47 // pred_fallthru
          _
      $region48: #{tpu_custom_call.1} parent=5 // pred_fallthru
        _
      %p976 = scmp.le.s32.totalorder 2, %s14
      // Predicated region
      $region57: #{tpu_custom_call.1} parent=5 // pred_check
        %p977 = pneg %p976
      $region58: #{tpu_custom_call.1} parent=5 // pred_check_branch
        %979 = sbr.rel (%p977) target = $region60
      $region59: #{tpu_custom_call.1} parent=5 // pred_region
        %s980 = ssub.s32 %s14, 2
        // Predicated region
        $region61: #{tpu_custom_call.1} parent=59 // pred_check
          %p981 = pneg %p195
        $region62: #{tpu_custom_call.1} parent=59 // pred_check_branch
          %983 = sbr.rel (%p981) target = $region64
        $region63: #{tpu_custom_call.1} parent=59 // pred_region
          %p984 = scmp.lt.s32.totalorder %s20, 1
          %s985 = scalar_select %p984, %s20, 1
          %s986 = smul.addr %s985, 8
          %s987 = scalar_lea.vmem %s7, %s986
        $region64: #{tpu_custom_call.1} parent=59 // pred_fallthru
          _
      $region60: #{tpu_custom_call.1} parent=5 // pred_fallthru
        _
    $region6: #{tpu_custom_call.1} parent=1 // loop_footer
      %s18 = sadd.s32 1, %s14
    $region7: #{tpu_custom_call.1} parent=1 // loop_footer_branch
      %13 = sbr.rel target = $region3
    $region8: #{tpu_custom_call.1} parent=1 // loop_exit
      _
    %988 = vsyncpa [#allocation3], 1
    %s989 = scalar_lea.sflag [#allocation3], 1
    %990 = vsyncpa %s989, 1

</llo_original>
